<compile_context>
chip_gen: v7x
topology: tpu7x:2x2x1
jax: 0.10.0
libtpu: 0.0.40
codegen_flags: <defaults>
</compile_context>

<pallas_src>
import functools
import math

import jax
import jax.numpy as jnp
from jax import lax
from jax.experimental import pallas as pl
from jax.experimental.pallas import tpu as pltpu

NEG_INF = -1.0e9


# ---------------- Pallas kernels ----------------

def _sdpa_kernel(q_ref, k_ref, o_ref, *, temperature):
    # q_ref: (H, tq, dk)   k_ref: (H, Sk, dk)   o_ref: (H, tq, Sk)
    q = q_ref[...].astype(jnp.float32) * temperature      # fold scale into smaller Q
    k = k_ref[...].astype(jnp.float32)
    # Batched over heads, contracting the last (dk) axes; no K^T materialized.
    s = lax.dot_general(q, k, (((2,), (2,)), ((0,), (0,))),
                        preferred_element_type=jnp.float32)      # (H, tq, Sk)
    s = s - jnp.max(s, axis=-1, keepdims=True)
    p = jnp.exp(s)
    inv = pl.reciprocal(jnp.sum(p, axis=-1, keepdims=True), approx=True)
    o_ref[...] = (p * inv).astype(o_ref.dtype)


def _sdpa_mask_kernel(q_ref, k_ref, m_ref, o_ref, *, temperature):
    # m_ref: (Hm, tq, Sk) with Hm in {1, H}; broadcasts over heads.
    q = q_ref[...].astype(jnp.float32) * temperature
    k = k_ref[...].astype(jnp.float32)
    s = lax.dot_general(q, k, (((2,), (2,)), ((0,), (0,))),
                        preferred_element_type=jnp.float32)
    s = jnp.where(m_ref[...] == 0, NEG_INF, s)
    s = s - jnp.max(s, axis=-1, keepdims=True)
    p = jnp.exp(s)
    inv = pl.reciprocal(jnp.sum(p, axis=-1, keepdims=True), approx=True)
    o_ref[...] = (p * inv).astype(o_ref.dtype)


# ---------------- wrapper ----------------

def _choose_q_tile(sq):
    """Largest query tile that keeps per-step VMEM bounded for big Sq."""
    if sq <= 256:
        return sq
    for t in (256, 128, 64, 32, 16, 8):
        if sq % t == 0:
            return t
    return sq


def scaled_dot_product_attention(q, k, temperature, mask=None):
    """softmax(q @ k^T * temperature) per (batch, head).

    q: (B, H, Sq, dk), k: (B, H, Sk, dk), mask: (B|1, H|1, Sq, Sk) or None.
    Returns attention weights (B, H, Sq, Sk) in q.dtype.
    """
    B, H, Sq, dk = q.shape
    Bk, Hk, Sk, dk2 = k.shape
    assert (B, H, dk) == (Bk, Hk, dk2)

    tq = _choose_q_tile(Sq)
    grid = (B, Sq // tq)

    q_spec = pl.BlockSpec((None, H, tq, dk), lambda b, i: (b, 0, i, 0))
    k_spec = pl.BlockSpec((None, H, Sk, dk), lambda b, i: (b, 0, 0, 0))
    o_spec = pl.BlockSpec((None, H, tq, Sk), lambda b, i: (b, 0, i, 0))

    cp = pltpu.CompilerParams(dimension_semantics=("parallel", "parallel"))
    out_shape = jax.ShapeDtypeStruct((B, H, Sq, Sk), q.dtype)
    temperature = float(temperature)

    if mask is None:
        return pl.pallas_call(
            functools.partial(_sdpa_kernel, temperature=temperature),
            out_shape=out_shape,
            grid=grid,
            in_specs=[q_spec, k_spec],
            out_specs=o_spec,
            compiler_params=cp,
        )(q, k)

    if mask.dtype == jnp.bool_:
        mask = mask.astype(jnp.int32)
    Bm, Hm = mask.shape[0], mask.shape[1]
    assert mask.shape[2:] == (Sq, Sk)
    m_spec = pl.BlockSpec((None, Hm, tq, Sk),
                          lambda b, i: (b if Bm > 1 else 0, 0, i, 0))
    return pl.pallas_call(
        functools.partial(_sdpa_mask_kernel, temperature=temperature),
        out_shape=out_shape,
        grid=grid,
        in_specs=[q_spec, k_spec, m_spec],
        out_specs=o_spec,
        compiler_params=cp,
    )(q, k, mask)


# ---------------- reference (pure JAX) ----------------

def sdpa_reference(q, k, temperature, mask=None):
    att = jnp.einsum('bhqd,bhkd->bhqk',
                     q.astype(jnp.float32), k.astype(jnp.float32)) * temperature
    if mask is not None:
        att = jnp.where(mask == 0, NEG_INF, att)
    return jax.nn.softmax(att, axis=-1).astype(q.dtype)


if __name__ == "__main__":
    key = jax.random.PRNGKey(0)
    kq, kk, km = jax.random.split(key, 3)

    B, H, S, DK = 2, 4, 8, 16
    temperature = 1.0 / math.sqrt(DK)

    q = jax.random.normal(kq, (B, H, S, DK), dtype=jnp.float32)
    k = jax.random.normal(kk, (B, H, S, DK), dtype=jnp.float32)
    mask = (jax.random.uniform(km, (B, 1, S, S)) > 0.25).astype(jnp.float32)

    fn = jax.jit(functools.partial(scaled_dot_product_attention,
                                   temperature=temperature))

    out = fn(q, k)                       # mask=None path
    out_m = fn(q, k, mask=mask)          # masked path
    jax.block_until_ready((out, out_m))

    ref = sdpa_reference(q, k, temperature)
    ref_m = sdpa_reference(q, k, temperature, mask)

    assert out.shape == (B, H, S, S) and out.dtype == jnp.float32
    assert out_m.shape == (B, H, S, S)
    assert bool(jnp.all(jnp.isfinite(out))) and bool(jnp.all(jnp.isfinite(out_m)))
    assert bool(jnp.allclose(out, ref, atol=5e-3, rtol=5e-3))
    assert bool(jnp.allclose(out_m, ref_m, atol=5e-3, rtol=5e-3))
    # softmax rows sum to ~1
    assert bool(jnp.allclose(jnp.sum(out, axis=-1), 1.0, atol=5e-3))

    print("KERNEL_OK")
</pallas_src>

<mosaic_0001>
module attributes {stable_mosaic.version = 11 : i64} {
  func.func @_sdpa_kernel(%arg0: i32, %arg1: i32, %arg2: memref<1x4x8x16xf32, #tpu.memory_space<vmem>>, %arg3: memref<1x4x8x16xf32, #tpu.memory_space<vmem>>, %arg4: memref<1x4x8x8xf32, #tpu.memory_space<vmem>>) attributes {dimension_semantics = [#tpu.dimension_semantics<parallel>, #tpu.dimension_semantics<parallel>], iteration_bounds = array<i64: 2, 1>, scalar_prefetch = 0 : i64, scratch_operands = 0 : i64, tpu.core_type = #tpu.core_type<tc>, window_params = [{transform_indices = @transform_0, window_bounds = array<i64: 1, 4, 8, 16>}, {transform_indices = @transform_1, window_bounds = array<i64: 1, 4, 8, 16>}, {transform_indices = @transform_2, window_bounds = array<i64: 1, 4, 8, 8>}]} {
    %c0 = arith.constant 0 : index
    %c0_0 = arith.constant 0 : index
    %c0_1 = arith.constant 0 : index
    %c0_2 = arith.constant 0 : index
    %0 = vector.load %arg2[%c0, %c0_0, %c0_1, %c0_2] : memref<1x4x8x16xf32, #tpu.memory_space<vmem>>, vector<1x4x8x16xf32>
    %1 = vector.shape_cast %0 : vector<1x4x8x16xf32> to vector<4x8x16xf32>
    %cst = arith.constant 2.500000e-01 : f32
    %2 = vector.broadcast %cst : f32 to vector<4x8x16xf32>
    %3 = arith.mulf %1, %2 : vector<4x8x16xf32>
    %c0_3 = arith.constant 0 : index
    %c0_4 = arith.constant 0 : index
    %c0_5 = arith.constant 0 : index
    %c0_6 = arith.constant 0 : index
    %4 = vector.load %arg3[%c0_3, %c0_4, %c0_5, %c0_6] : memref<1x4x8x16xf32, #tpu.memory_space<vmem>>, vector<1x4x8x16xf32>
    %5 = vector.shape_cast %4 : vector<1x4x8x16xf32> to vector<4x8x16xf32>
    %cst_7 = arith.constant dense<0.000000e+00> : vector<4x8x8xf32>
    %6 = tpu.matmul %3, %5, %cst_7 {dimension_numbers = #tpu.dot_dimension_numbers<[2], [2], [1], [1], [0, 0, 0, 1, 1, 1], [0], [0]>} : vector<4x8x16xf32>, vector<4x8x16xf32>, vector<4x8x8xf32> -> vector<4x8x8xf32>
    %cst_8 = arith.constant dense<0xFF800000> : vector<4x8xf32>
    %7 = vector.multi_reduction <maximumf>, %6, %cst_8 [2] : vector<4x8x8xf32> to vector<4x8xf32>
    %8 = vector.shape_cast %7 : vector<4x8xf32> to vector<4x8x1xf32>
    %9 = vector.broadcast %8 : vector<4x8x1xf32> to vector<4x8x8xf32>
    %10 = arith.subf %6, %9 : vector<4x8x8xf32>
    %11 = math.exp %10 : vector<4x8x8xf32>
    %cst_9 = arith.constant dense<0.000000e+00> : vector<4x8xf32>
    %12 = vector.multi_reduction <add>, %11, %cst_9 [2] : vector<4x8x8xf32> to vector<4x8xf32>
    %13 = vector.shape_cast %12 : vector<4x8xf32> to vector<4x8x1xf32>
    %14 = tpu.reciprocal %13 {approx = true} : vector<4x8x1xf32> -> vector<4x8x1xf32>
    %15 = vector.broadcast %14 : vector<4x8x1xf32> to vector<4x8x8xf32>
    %16 = arith.mulf %11, %15 : vector<4x8x8xf32>
    %c0_10 = arith.constant 0 : index
    %c0_11 = arith.constant 0 : index
    %c0_12 = arith.constant 0 : index
    %c0_13 = arith.constant 0 : index
    %17 = vector.load %arg4[%c0_10, %c0_11, %c0_12, %c0_13] : memref<1x4x8x8xf32, #tpu.memory_space<vmem>>, vector<1x4x8x8xf32>
    %18 = vector.shape_cast %17 : vector<1x4x8x8xf32> to vector<4x8x8xf32>
    %19 = vector.shape_cast %16 : vector<4x8x8xf32> to vector<1x4x8x8xf32>
    tpu.vector_store %arg4[%c0_10, %c0_11, %c0_12, %c0_13], %19 {strides = array<i32>} : memref<1x4x8x8xf32, #tpu.memory_space<vmem>>, vector<1x4x8x8xf32>,
    return
  }
  func.func @transform_0(%arg0: i32, %arg1: i32) -> (i32, i32, i32, i32) {
    %c0_i32 = arith.constant 0 : i32
    %c0_i32_0 = arith.constant 0 : i32
    %c0_i32_1 = arith.constant 0 : i32
    return %arg0, %c0_i32, %arg1, %c0_i32_0 : i32, i32, i32, i32
  }
  func.func @transform_1(%arg0: i32, %arg1: i32) -> (i32, i32, i32, i32) {
    %c0_i32 = arith.constant 0 : i32
    %c0_i32_0 = arith.constant 0 : i32
    %c0_i32_1 = arith.constant 0 : i32
    %c0_i32_2 = arith.constant 0 : i32
    return %arg0, %c0_i32, %c0_i32_0, %c0_i32_1 : i32, i32, i32, i32
  }
  func.func @transform_2(%arg0: i32, %arg1: i32) -> (i32, i32, i32, i32) {
    %c0_i32 = arith.constant 0 : i32
    %c0_i32_0 = arith.constant 0 : i32
    %c0_i32_1 = arith.constant 0 : i32
    return %arg0, %c0_i32, %arg1, %c0_i32_0 : i32, i32, i32, i32
  }
}

</mosaic_0001>

<llo_original>
// kernel: scaled_dot_product_attention.1
$region0: #{scaled_dot_product_attention.1}
  #allocation0 [shape = 'u32[]', space=smem, size = 0x4, offset = 0x4, fixed_abs, tag = 'smem constant byte address 0x4 - core index']
  #allocation1 [shape = 'u32[144,128]{1,0:T(1,128)}', space=vmem, size = 0x12000, scoped, tag = 'internal scratch']
  %s0 = inlined_call_operand.hbm [shape: f32[2,4,8,16], index: 0, kind: input, shape index: {}]
  %s1 = inlined_call_operand.hbm [shape: f32[2,4,8,16], index: 1, kind: input, shape index: {}]
  %s2 = inlined_call_operand.hbm [shape: f32[2,4,8,8], index: 2, kind: output, shape index: {}]
  %s3 = sld [smem:[#allocation0]]
  $region49: #{scaled_dot_product_attention.1} parent=0
    _
  %s5 = ssub.s32 1, %s3
  %s6 = scalar_select 0, %s5, %s3
  $region1: #{scaled_dot_product_attention.1} parent=0
    #allocation2 [shape = 'u8[32768]{0}', space=vmem, size = 0x8000, scoped, tag = 'input window, operand 0']
    #allocation3 [shape = 's32[2]{0}', space=sflag, size = 0x8, scoped, tag = 'scoped memory for scaled_dot_product_attention.1']
    #allocation4 [shape = 's32[2]{0}', space=sflag, size = 0x8, scoped, tag = 'scoped memory for scaled_dot_product_attention.1']
    #allocation5 [shape = 'u8[32768]{0}', space=vmem, size = 0x8000, scoped, tag = 'input window, operand 1']
    #allocation6 [shape = 's32[2]{0}', space=sflag, size = 0x8, scoped, tag = 'scoped memory for scaled_dot_product_attention.1']
    #allocation7 [shape = 'u8[32768]{0}', space=vmem, size = 0x8000, scoped, tag = 'output window, operand 0']
    %7 = vsyncpa [#allocation3], 0
    %s8 = scalar_lea.sflag [#allocation3], 1
    %9 = vsyncpa %s8, 0
    %10 = vsyncpa [#allocation6], 0
    %s11 = scalar_lea.sflag [#allocation6], 1
    %12 = vsyncpa %s11, 0
    %13 = vsyncpa [#allocation4], 0
    %s14 = scalar_lea.sflag [#allocation4], 1
    %15 = vsyncpa %s14, 0
    loop: start=0, step=1, limit=4
    $region2: #{scaled_dot_product_attention.1} parent=1 // loop_pre_header
      _
    $region3: #{scaled_dot_product_attention.1} parent=1 // loop_header
      %s17 = sphi 0, %s21
      %p18 = scmp.ge.s32.totalorder %s17, 4
      %s24 = sphi 0, %s36
      %s25 = sphi 0, %s32
      %s26 = sphi 0, %s24
      %s27 = sphi 0, %s25
      %s28 = sphi 0, %s26
      %s29 = sphi 0, %s27
      %s41 = sphi 0, %s43
      %s44 = sphi 0, %s41
      %s45 = sphi 0, %s44
      %s61 = sphi 0, %s45
      %s67 = sphi 0, %s69
      %s70 = sphi 0, %s67
      %s71 = sphi 0, %s70
      %s87 = sphi 0, %s71
      %s95 = sphi 0, %s97
      %s98 = sphi 0, %s95
      %s99 = sphi 0, %s98
      %s115 = sphi 0, %s99
    $region4: #{scaled_dot_product_attention.1} parent=1 // loop_header_branch
      %20 = sbr.rel (%p18) target = $region8
    $region5: #{scaled_dot_product_attention.1} parent=1 // loop_body
      %s22 = ssub.s32 %s17, 1
      %s23 = ssub.s32 %s17, 2
      %s30 = sadd.s32 1, %s25
      %p31 = scmp.ge.s32.totalorder %s30, 1
      %s32 = scalar_select %p31, 0, %s30
      %s33 = sadd.s32 1, %s24
      %s34 = scalar_select %p31, %s33, %s24
      %p35 = scmp.ge.s32.totalorder %s34, 2
      %s36 = scalar_select %p35, 0, %s34
      %s37 = ssub.s32 %s24, %s36
      %s38 = ssub.s32 %s25, %s32
      %s39 = sor.u32 %s37, %s38
      %p40 = scmp.eq.s32.totalorder %s39, 0
      %s42 = sadd.s32 %s41, 1
      %s43 = scalar_select %p40, %s41, %s42
      %p46 = pneg %p40
      %p47 = scmp.eq.s32.totalorder %s17, 1
      %p48 = por %p46, %p47
      %p49 = scmp.ne.s32.totalorder %s41, %s44
      %p50 = scmp.eq.s32.totalorder %s17, 0
      %p51 = por %p49, %p50
      %p52 = scmp.ne.s32.totalorder %s41, %s44
      %p53 = scmp.eq.s32.totalorder %s22, 1
      %p54 = por %p52, %p53
      %p55 = scmp.ne.s32.totalorder %s44, %s45
      %p56 = scmp.eq.s32.totalorder %s22, 0
      %p57 = por %p55, %p56
      %p58 = scmp.ne.s32.totalorder %s44, %s45
      %p59 = scmp.eq.s32.totalorder %s23, 1
      %p60 = por %p58, %p59
      %p62 = scmp.ne.s32.totalorder %s45, %s61
      %p63 = scmp.eq.s32.totalorder %s23, 0
      %p64 = por %p62, %p63
      %s65 = ssub.s32 %s24, %s36
      %p66 = scmp.eq.s32.totalorder %s65, 0
      %s68 = sadd.s32 %s67, 1
      %s69 = scalar_select %p66, %s67, %s68
      %p72 = pneg %p66
      %p73 = scmp.eq.s32.totalorder %s17, 1
      %p74 = por %p72, %p73
      %p75 = scmp.ne.s32.totalorder %s67, %s70
      %p76 = scmp.eq.s32.totalorder %s17, 0
      %p77 = por %p75, %p76
      %p78 = scmp.ne.s32.totalorder %s67, %s70
      %p79 = scmp.eq.s32.totalorder %s22, 1
      %p80 = por %p78, %p79
      %p81 = scmp.ne.s32.totalorder %s70, %s71
      %p82 = scmp.eq.s32.totalorder %s22, 0
      %p83 = por %p81, %p82
      %p84 = scmp.ne.s32.totalorder %s70, %s71
      %p85 = scmp.eq.s32.totalorder %s23, 1
      %p86 = por %p84, %p85
      %p88 = scmp.ne.s32.totalorder %s71, %s87
      %p89 = scmp.eq.s32.totalorder %s23, 0
      %p90 = por %p88, %p89
      %s91 = ssub.s32 %s24, %s36
      %s92 = ssub.s32 %s25, %s32
      %s93 = sor.u32 %s91, %s92
      %p94 = scmp.eq.s32.totalorder %s93, 0
      %s96 = sadd.s32 %s95, 1
      %s97 = scalar_select %p94, %s95, %s96
      %p100 = pneg %p94
      %p101 = scmp.eq.s32.totalorder %s17, 1
      %p102 = por %p100, %p101
      %p103 = scmp.ne.s32.totalorder %s95, %s98
      %p104 = scmp.eq.s32.totalorder %s17, 0
      %p105 = por %p103, %p104
      %p106 = scmp.ne.s32.totalorder %s95, %s98
      %p107 = scmp.eq.s32.totalorder %s22, 1
      %p108 = por %p106, %p107
      %p109 = scmp.ne.s32.totalorder %s98, %s99
      %p110 = scmp.eq.s32.totalorder %s22, 0
      %p111 = por %p109, %p110
      %p112 = scmp.ne.s32.totalorder %s98, %s99
      %p113 = scmp.eq.s32.totalorder %s23, 1
      %p114 = por %p112, %p113
      %p116 = scmp.ne.s32.totalorder %s99, %s115
      %p117 = scmp.eq.s32.totalorder %s23, 0
      %p118 = por %p116, %p117
      %p119 = scmp.le.s32.totalorder 1, %s17
      %p120 = scmp.lt.s32.totalorder %s17, 3
      %p121 = pnand %p119, %p120
      %p122 = pneg %p121
      // Predicated region
      $region9: #{scaled_dot_product_attention.1} parent=5 // pred_check
        _
      $region10: #{scaled_dot_product_attention.1} parent=5 // pred_check_branch
        %124 = sbr.rel (%p121) target = $region12
      $region11: #{scaled_dot_product_attention.1} parent=5 // pred_region
        %s125 = ssub.s32 %s17, 1
      $region12: #{scaled_dot_product_attention.1} parent=5 // pred_fallthru
        _
      %p126 = scmp.lt.s32.totalorder %s17, 2
      // Predicated region
      $region13: #{scaled_dot_product_attention.1} parent=5 // pred_check
        %p127 = pneg %p126
      $region14: #{scaled_dot_product_attention.1} parent=5 // pred_check_branch
        %129 = sbr.rel (%p127) target = $region16
      $region15: #{scaled_dot_product_attention.1} parent=5 // pred_region
        // Predicated region
        $region17: #{scaled_dot_product_attention.1} parent=15 // pred_check
          %p130 = pneg %p51
        $region18: #{scaled_dot_product_attention.1} parent=15 // pred_check_branch
          %132 = sbr.rel (%p130) target = $region20
        $region19: #{scaled_dot_product_attention.1} parent=15 // pred_region
          %s133 = sand.u32 %s41, 1
          %s134 = scalar_lea.sflag [#allocation3], %s133
          %s135 = sand.u32 %s41, 1
          %s136 = smul.addr %s135, 32
          %s137 = scalar_lea.vmem [#allocation2], %s136
          %s139 = ssub.s32 512, 512
          %140 = vsyncadd %s134, %s139
          %s141 = smul.addr %s24, 4
          %s142 = sadd.s32 %s25, %s141
          %s143 = smul.addr %s142, 128
          %s144 = scalar_lea.hbm %s0, %s143
          %s145 = sshll.u32 %s137, 4
          %s146 = int_to_ptr.vmem [resolvable:$true] %s145
          %151 = dma.hbm_to_vmem [thread:$0]  %s144, 512, %s146, %s134, 128, 128, 8
        $region20: #{scaled_dot_product_attention.1} parent=15 // pred_fallthru
          _
        // Predicated region
        $region21: #{scaled_dot_product_attention.1} parent=15 // pred_check
          %p152 = pneg %p77
        $region22: #{scaled_dot_product_attention.1} parent=15 // pred_check_branch
          %154 = sbr.rel (%p152) target = $region24
        $region23: #{scaled_dot_product_attention.1} parent=15 // pred_region
          %s155 = sand.u32 %s67, 1
          %s156 = scalar_lea.sflag [#allocation6], %s155
          %s157 = sand.u32 %s67, 1
          %s158 = smul.addr %s157, 32
          %s159 = scalar_lea.vmem [#allocation5], %s158
          %s161 = ssub.s32 512, 512
          %162 = vsyncadd %s156, %s161
          %s163 = smul.addr %s24, 4
          %s164 = smul.addr %s163, 128
          %s165 = scalar_lea.hbm %s1, %s164
          %s166 = sshll.u32 %s159, 4
          %s167 = int_to_ptr.vmem [resolvable:$true] %s166
          %172 = dma.hbm_to_vmem [thread:$0]  %s165, 512, %s167, %s156, 128, 128, 8
        $region24: #{scaled_dot_product_attention.1} parent=15 // pred_fallthru
          _
      $region16: #{scaled_dot_product_attention.1} parent=5 // pred_fallthru
        _
      %p173 = scmp.le.s32.totalorder 1, %s17
      %p174 = scmp.lt.s32.totalorder %s17, 3
      %p175 = pnand %p173, %p174
      %p176 = pneg %p175
      // Predicated region
      $region25: #{scaled_dot_product_attention.1} parent=5 // pred_check
        _
      $region26: #{scaled_dot_product_attention.1} parent=5 // pred_check_branch
        %178 = sbr.rel (%p175) target = $region28
      $region27: #{scaled_dot_product_attention.1} parent=5 // pred_region
        %s179 = ssub.s32 %s17, 1
        %s180 = sand.u32 %s44, 1
        %s181 = scalar_lea.sflag [#allocation3], %s180
        %s182 = sand.u32 %s44, 1
        %s183 = smul.addr %s182, 32
        %s184 = scalar_lea.vmem [#allocation2], %s183
        // Predicated region
        $region29: #{scaled_dot_product_attention.1} parent=27 // pred_check
          %p185 = pneg %p57
        $region30: #{scaled_dot_product_attention.1} parent=27 // pred_check_branch
          %187 = sbr.rel (%p185) target = $region32
        $region31: #{scaled_dot_product_attention.1} parent=27 // pred_region
          %188 = dma.done %s181, 512
        $region32: #{scaled_dot_product_attention.1} parent=27 // pred_fallthru
          _
        %s189 = sand.u32 %s70, 1
        %s190 = scalar_lea.sflag [#allocation6], %s189
        %s191 = sand.u32 %s70, 1
        %s192 = smul.addr %s191, 32
        %s193 = scalar_lea.vmem [#allocation5], %s192
        // Predicated region
        $region33: #{scaled_dot_product_attention.1} parent=27 // pred_check
          %p194 = pneg %p83
        $region34: #{scaled_dot_product_attention.1} parent=27 // pred_check_branch
          %196 = sbr.rel (%p194) target = $region36
        $region35: #{scaled_dot_product_attention.1} parent=27 // pred_region
          %197 = dma.done %s190, 512
        $region36: #{scaled_dot_product_attention.1} parent=27 // pred_fallthru
          _
        %s198 = sand.u32 %s44, 1
        %s199 = scalar_lea.sflag [#allocation3], %s198
        %s200 = sand.u32 %s44, 1
        %s201 = smul.addr %s200, 32
        %s202 = scalar_lea.vmem [#allocation2], %s201
        %p203 = pneg %p57
        %p204 = pneg %p54
        %s205 = sand.u32 %s70, 1
        %s206 = scalar_lea.sflag [#allocation6], %s205
        %s207 = sand.u32 %s70, 1
        %s208 = smul.addr %s207, 32
        %s209 = scalar_lea.vmem [#allocation5], %s208
        %p210 = pneg %p83
        %p211 = pneg %p80
        %p212 = pneg %p111
        %p213 = pneg %p108
        %s214 = sand.u32 %s98, 1
        %s215 = scalar_lea.sflag [#allocation4], %s214
        %s216 = sand.u32 %s98, 1
        %s217 = smul.addr %s216, 32
        %s218 = scalar_lea.vmem [#allocation7], %s217
        %v219 = vld [vmem:[%s184] sm:$0xff]
        %v220 = vld [vmem:[%s184 + $0x8] sm:$0xff]
        %v221 = vld [vmem:[%s184 + $0x10] sm:$0xff]
        %v222 = vld [vmem:[%s184 + $0x18] sm:$0xff]
        %v223 = vmul.f32 %v219, 0.25
        %v224 = vmul.f32 %v220, 0.25
        %v225 = vmul.f32 %v221, 0.25
        %v226 = vmul.f32 %v222, 0.25
        %v227 = vld [vmem:[%s193] sm:$0xff]
        %v228 = vld [vmem:[%s193 + $0x8] sm:$0xff]
        %v229 = vld [vmem:[%s193 + $0x10] sm:$0xff]
        %v230 = vld [vmem:[%s193 + $0x18] sm:$0xff]
        %vm231 = vcmask 130048
        %v233 = vsel %vm231, %v223, 0
        %v236 = vsel %vm231, %v227, 0
        %238 = vmatprep.subr.mxu0 0.0
        %239 = vmatpush1.xpose.msra.mxu0 %v236
        %240 = vmatprep.subr.mxu0 0.0
        %241 = vmatpush1.xpose.msra.mxu0 0.0
        %242 = vmatprep.subr.mxu0 0.0
        %243 = vmatpush1.xpose.msra.mxu0 0.0
        %244 = vmatprep.subr.mxu0 0.0
        %245 = vmatpush1.xpose.msra.mxu0 0.0
        %246 = vmatprep.subr.mxu0 0.0
        %247 = vmatpush1.xpose.msra.mxu0 0.0
        %248 = vmatprep.subr.mxu0 0.0
        %249 = vmatpush1.xpose.msra.mxu0 0.0
        %250 = vmatprep.subr.mxu0 0.0
        %251 = vmatpush1.xpose.msra.mxu0 0.0
        %252 = vmatprep.subr.mxu0 0.0
        %253 = vmatpush1.xpose.msra.mxu0 0.0
        %254 = vmatprep.subr.mxu0 0.0
        %255 = vmatpush1.xpose.msra.mxu0 0.0
        %256 = vmatprep.subr.mxu0 0.0
        %257 = vmatpush1.xpose.msra.mxu0 0.0
        %258 = vmatprep.subr.mxu0 0.0
        %259 = vmatpush1.xpose.msra.mxu0 0.0
        %260 = vmatprep.subr.mxu0 0.0
        %261 = vmatpush1.xpose.msra.mxu0 0.0
        %262 = vmatprep.subr.mxu0 0.0
        %263 = vmatpush1.xpose.msra.mxu0 0.0
        %264 = vmatprep.subr.mxu0 0.0
        %265 = vmatpush1.xpose.msra.mxu0 0.0
        %266 = vmatprep.subr.mxu0 0.0
        %267 = vmatpush1.xpose.msra.mxu0 0.0
        %268 = vmatprep.subr.mxu0 0.0
        %269 = vmatpush1.xpose.msra.mxu0 0.0
        %270 = vmatprep.subr.mxu0 0.0
        %271 = vmatpush1.xpose.msra.mxu0 0.0
        %272 = vmatprep.subr.mxu0 0.0
        %273 = vmatpush1.xpose.msra.mxu0 0.0
        %274 = vmatprep.subr.mxu0 0.0
        %275 = vmatpush1.xpose.msra.mxu0 0.0
        %276 = vmatprep.subr.mxu0 0.0
        %277 = vmatpush1.xpose.msra.mxu0 0.0
        %278 = vmatprep.subr.mxu0 0.0
        %279 = vmatpush1.xpose.msra.mxu0 0.0
        %280 = vmatprep.subr.mxu0 0.0
        %281 = vmatpush1.xpose.msra.mxu0 0.0
        %282 = vmatprep.subr.mxu0 0.0
        %283 = vmatpush1.xpose.msra.mxu0 0.0
        %284 = vmatprep.subr.mxu0 0.0
        %285 = vmatpush1.xpose.msra.mxu0 0.0
        %286 = vmatprep.subr.mxu0 0.0
        %287 = vmatpush1.xpose.msra.mxu0 0.0
        %288 = vmatprep.subr.mxu0 0.0
        %289 = vmatpush1.xpose.msra.mxu0 0.0
        %290 = vmatprep.subr.mxu0 0.0
        %291 = vmatpush1.xpose.msra.mxu0 0.0
        %292 = vmatprep.subr.mxu0 0.0
        %293 = vmatpush1.xpose.msra.mxu0 0.0
        %294 = vmatprep.subr.mxu0 0.0
        %295 = vmatpush1.xpose.msra.mxu0 0.0
        %296 = vmatprep.subr.mxu0 0.0
        %297 = vmatpush1.xpose.msra.mxu0 0.0
        %298 = vmatprep.subr.mxu0 0.0
        %299 = vmatpush1.xpose.msra.mxu0 0.0
        %300 = vmatprep.subr.mxu0 0.0
        %301 = vmatpush1.xpose.msra.mxu0 0.0
        %302 = vmatprep.mubr.f32.mxu0 0.0
        %303 = vmatmul.mubr.f32.gmra.mrb[0].mxu0 %v233
        %v304 = vpop.f32.mrb[0].mxu0
        %v305 = vadd.f32 0.0, %v304
        %v306 = vpop.f32.mrb[0].mxu0
        %307 = vdwg.mxu0
        %v309 = vsel %vm231, %v224, 0
        %v312 = vsel %vm231, %v228, 0
        %314 = vmatprep.subr.mxu0 0.0
        %315 = vmatpush1.xpose.msra.mxu0 %v312
        %316 = vmatprep.subr.mxu0 0.0
        %317 = vmatpush1.xpose.msra.mxu0 0.0
        %318 = vmatprep.subr.mxu0 0.0
        %319 = vmatpush1.xpose.msra.mxu0 0.0
        %320 = vmatprep.subr.mxu0 0.0
        %321 = vmatpush1.xpose.msra.mxu0 0.0
        %322 = vmatprep.subr.mxu0 0.0
        %323 = vmatpush1.xpose.msra.mxu0 0.0
        %324 = vmatprep.subr.mxu0 0.0
        %325 = vmatpush1.xpose.msra.mxu0 0.0
        %326 = vmatprep.subr.mxu0 0.0
        %327 = vmatpush1.xpose.msra.mxu0 0.0
        %328 = vmatprep.subr.mxu0 0.0
        %329 = vmatpush1.xpose.msra.mxu0 0.0
        %330 = vmatprep.subr.mxu0 0.0
        %331 = vmatpush1.xpose.msra.mxu0 0.0
        %332 = vmatprep.subr.mxu0 0.0
        %333 = vmatpush1.xpose.msra.mxu0 0.0
        %334 = vmatprep.subr.mxu0 0.0
        %335 = vmatpush1.xpose.msra.mxu0 0.0
        %336 = vmatprep.subr.mxu0 0.0
        %337 = vmatpush1.xpose.msra.mxu0 0.0
        %338 = vmatprep.subr.mxu0 0.0
        %339 = vmatpush1.xpose.msra.mxu0 0.0
        %340 = vmatprep.subr.mxu0 0.0
        %341 = vmatpush1.xpose.msra.mxu0 0.0
        %342 = vmatprep.subr.mxu0 0.0
        %343 = vmatpush1.xpose.msra.mxu0 0.0
        %344 = vmatprep.subr.mxu0 0.0
        %345 = vmatpush1.xpose.msra.mxu0 0.0
        %346 = vmatprep.subr.mxu0 0.0
        %347 = vmatpush1.xpose.msra.mxu0 0.0
        %348 = vmatprep.subr.mxu0 0.0
        %349 = vmatpush1.xpose.msra.mxu0 0.0
        %350 = vmatprep.subr.mxu0 0.0
        %351 = vmatpush1.xpose.msra.mxu0 0.0
        %352 = vmatprep.subr.mxu0 0.0
        %353 = vmatpush1.xpose.msra.mxu0 0.0
        %354 = vmatprep.subr.mxu0 0.0
        %355 = vmatpush1.xpose.msra.mxu0 0.0
        %356 = vmatprep.subr.mxu0 0.0
        %357 = vmatpush1.xpose.msra.mxu0 0.0
        %358 = vmatprep.subr.mxu0 0.0
        %359 = vmatpush1.xpose.msra.mxu0 0.0
        %360 = vmatprep.subr.mxu0 0.0
        %361 = vmatpush1.xpose.msra.mxu0 0.0
        %362 = vmatprep.subr.mxu0 0.0
        %363 = vmatpush1.xpose.msra.mxu0 0.0
        %364 = vmatprep.subr.mxu0 0.0
        %365 = vmatpush1.xpose.msra.mxu0 0.0
        %366 = vmatprep.subr.mxu0 0.0
        %367 = vmatpush1.xpose.msra.mxu0 0.0
        %368 = vmatprep.subr.mxu0 0.0
        %369 = vmatpush1.xpose.msra.mxu0 0.0
        %370 = vmatprep.subr.mxu0 0.0
        %371 = vmatpush1.xpose.msra.mxu0 0.0
        %372 = vmatprep.subr.mxu0 0.0
        %373 = vmatpush1.xpose.msra.mxu0 0.0
        %374 = vmatprep.subr.mxu0 0.0
        %375 = vmatpush1.xpose.msra.mxu0 0.0
        %376 = vmatprep.subr.mxu0 0.0
        %377 = vmatpush1.xpose.msra.mxu0 0.0
        %378 = vmatprep.mubr.f32.mxu0 0.0
        %379 = vmatmul.mubr.f32.gmra.mrb[0].mxu0 %v309
        %v380 = vpop.f32.mrb[0].mxu0
        %v381 = vadd.f32 0.0, %v380
        %v382 = vpop.f32.mrb[0].mxu0
        %383 = vdwg.mxu0
        %v385 = vsel %vm231, %v225, 0
        %v388 = vsel %vm231, %v229, 0
        %390 = vmatprep.subr.mxu0 0.0
        %391 = vmatpush1.xpose.msra.mxu0 %v388
        %392 = vmatprep.subr.mxu0 0.0
        %393 = vmatpush1.xpose.msra.mxu0 0.0
        %394 = vmatprep.subr.mxu0 0.0
        %395 = vmatpush1.xpose.msra.mxu0 0.0
        %396 = vmatprep.subr.mxu0 0.0
        %397 = vmatpush1.xpose.msra.mxu0 0.0
        %398 = vmatprep.subr.mxu0 0.0
        %399 = vmatpush1.xpose.msra.mxu0 0.0
        %400 = vmatprep.subr.mxu0 0.0
        %401 = vmatpush1.xpose.msra.mxu0 0.0
        %402 = vmatprep.subr.mxu0 0.0
        %403 = vmatpush1.xpose.msra.mxu0 0.0
        %404 = vmatprep.subr.mxu0 0.0
        %405 = vmatpush1.xpose.msra.mxu0 0.0
        %406 = vmatprep.subr.mxu0 0.0
        %407 = vmatpush1.xpose.msra.mxu0 0.0
        %408 = vmatprep.subr.mxu0 0.0
        %409 = vmatpush1.xpose.msra.mxu0 0.0
        %410 = vmatprep.subr.mxu0 0.0
        %411 = vmatpush1.xpose.msra.mxu0 0.0
        %412 = vmatprep.subr.mxu0 0.0
        %413 = vmatpush1.xpose.msra.mxu0 0.0
        %414 = vmatprep.subr.mxu0 0.0
        %415 = vmatpush1.xpose.msra.mxu0 0.0
        %416 = vmatprep.subr.mxu0 0.0
        %417 = vmatpush1.xpose.msra.mxu0 0.0
        %418 = vmatprep.subr.mxu0 0.0
        %419 = vmatpush1.xpose.msra.mxu0 0.0
        %420 = vmatprep.subr.mxu0 0.0
        %421 = vmatpush1.xpose.msra.mxu0 0.0
        %422 = vmatprep.subr.mxu0 0.0
        %423 = vmatpush1.xpose.msra.mxu0 0.0
        %424 = vmatprep.subr.mxu0 0.0
        %425 = vmatpush1.xpose.msra.mxu0 0.0
        %426 = vmatprep.subr.mxu0 0.0
        %427 = vmatpush1.xpose.msra.mxu0 0.0
        %428 = vmatprep.subr.mxu0 0.0
        %429 = vmatpush1.xpose.msra.mxu0 0.0
        %430 = vmatprep.subr.mxu0 0.0
        %431 = vmatpush1.xpose.msra.mxu0 0.0
        %432 = vmatprep.subr.mxu0 0.0
        %433 = vmatpush1.xpose.msra.mxu0 0.0
        %434 = vmatprep.subr.mxu0 0.0
        %435 = vmatpush1.xpose.msra.mxu0 0.0
        %436 = vmatprep.subr.mxu0 0.0
        %437 = vmatpush1.xpose.msra.mxu0 0.0
        %438 = vmatprep.subr.mxu0 0.0
        %439 = vmatpush1.xpose.msra.mxu0 0.0
        %440 = vmatprep.subr.mxu0 0.0
        %441 = vmatpush1.xpose.msra.mxu0 0.0
        %442 = vmatprep.subr.mxu0 0.0
        %443 = vmatpush1.xpose.msra.mxu0 0.0
        %444 = vmatprep.subr.mxu0 0.0
        %445 = vmatpush1.xpose.msra.mxu0 0.0
        %446 = vmatprep.subr.mxu0 0.0
        %447 = vmatpush1.xpose.msra.mxu0 0.0
        %448 = vmatprep.subr.mxu0 0.0
        %449 = vmatpush1.xpose.msra.mxu0 0.0
        %450 = vmatprep.subr.mxu0 0.0
        %451 = vmatpush1.xpose.msra.mxu0 0.0
        %452 = vmatprep.subr.mxu0 0.0
        %453 = vmatpush1.xpose.msra.mxu0 0.0
        %454 = vmatprep.mubr.f32.mxu0 0.0
        %455 = vmatmul.mubr.f32.gmra.mrb[0].mxu0 %v385
        %v456 = vpop.f32.mrb[0].mxu0
        %v457 = vadd.f32 0.0, %v456
        %v458 = vpop.f32.mrb[0].mxu0
        %459 = vdwg.mxu0
        %v461 = vsel %vm231, %v226, 0
        %v464 = vsel %vm231, %v230, 0
        %466 = vmatprep.subr.mxu0 0.0
        %467 = vmatpush1.xpose.msra.mxu0 %v464
        %468 = vmatprep.subr.mxu0 0.0
        %469 = vmatpush1.xpose.msra.mxu0 0.0
        %470 = vmatprep.subr.mxu0 0.0
        %471 = vmatpush1.xpose.msra.mxu0 0.0
        %472 = vmatprep.subr.mxu0 0.0
        %473 = vmatpush1.xpose.msra.mxu0 0.0
        %474 = vmatprep.subr.mxu0 0.0
        %475 = vmatpush1.xpose.msra.mxu0 0.0
        %476 = vmatprep.subr.mxu0 0.0
        %477 = vmatpush1.xpose.msra.mxu0 0.0
        %478 = vmatprep.subr.mxu0 0.0
        %479 = vmatpush1.xpose.msra.mxu0 0.0
        %480 = vmatprep.subr.mxu0 0.0
        %481 = vmatpush1.xpose.msra.mxu0 0.0
        %482 = vmatprep.subr.mxu0 0.0
        %483 = vmatpush1.xpose.msra.mxu0 0.0
        %484 = vmatprep.subr.mxu0 0.0
        %485 = vmatpush1.xpose.msra.mxu0 0.0
        %486 = vmatprep.subr.mxu0 0.0
        %487 = vmatpush1.xpose.msra.mxu0 0.0
        %488 = vmatprep.subr.mxu0 0.0
        %489 = vmatpush1.xpose.msra.mxu0 0.0
        %490 = vmatprep.subr.mxu0 0.0
        %491 = vmatpush1.xpose.msra.mxu0 0.0
        %492 = vmatprep.subr.mxu0 0.0
        %493 = vmatpush1.xpose.msra.mxu0 0.0
        %494 = vmatprep.subr.mxu0 0.0
        %495 = vmatpush1.xpose.msra.mxu0 0.0
        %496 = vmatprep.subr.mxu0 0.0
        %497 = vmatpush1.xpose.msra.mxu0 0.0
        %498 = vmatprep.subr.mxu0 0.0
        %499 = vmatpush1.xpose.msra.mxu0 0.0
        %500 = vmatprep.subr.mxu0 0.0
        %501 = vmatpush1.xpose.msra.mxu0 0.0
        %502 = vmatprep.subr.mxu0 0.0
        %503 = vmatpush1.xpose.msra.mxu0 0.0
        %504 = vmatprep.subr.mxu0 0.0
        %505 = vmatpush1.xpose.msra.mxu0 0.0
        %506 = vmatprep.subr.mxu0 0.0
        %507 = vmatpush1.xpose.msra.mxu0 0.0
        %508 = vmatprep.subr.mxu0 0.0
        %509 = vmatpush1.xpose.msra.mxu0 0.0
        %510 = vmatprep.subr.mxu0 0.0
        %511 = vmatpush1.xpose.msra.mxu0 0.0
        %512 = vmatprep.subr.mxu0 0.0
        %513 = vmatpush1.xpose.msra.mxu0 0.0
        %514 = vmatprep.subr.mxu0 0.0
        %515 = vmatpush1.xpose.msra.mxu0 0.0
        %516 = vmatprep.subr.mxu0 0.0
        %517 = vmatpush1.xpose.msra.mxu0 0.0
        %518 = vmatprep.subr.mxu0 0.0
        %519 = vmatpush1.xpose.msra.mxu0 0.0
        %520 = vmatprep.subr.mxu0 0.0
        %521 = vmatpush1.xpose.msra.mxu0 0.0
        %522 = vmatprep.subr.mxu0 0.0
        %523 = vmatpush1.xpose.msra.mxu0 0.0
        %524 = vmatprep.subr.mxu0 0.0
        %525 = vmatpush1.xpose.msra.mxu0 0.0
        %526 = vmatprep.subr.mxu0 0.0
        %527 = vmatpush1.xpose.msra.mxu0 0.0
        %528 = vmatprep.subr.mxu0 0.0
        %529 = vmatpush1.xpose.msra.mxu0 0.0
        %530 = vmatprep.mubr.f32.mxu0 0.0
        %531 = vmatmul.mubr.f32.gmra.mrb[0].mxu0 %v461
        %v532 = vpop.f32.mrb[0].mxu0
        %v533 = vadd.f32 0.0, %v532
        %v534 = vpop.f32.mrb[0].mxu0
        %535 = vdwg.mxu0
        %vm536 = vcmask 64512
        %v537 = vsel %vm536, %v305, -inf
        %538 = vmax.xlane.f32.xlu0 %v537
        %v539 = vpop.xlane.xlu0 %538
        %v540 = vsel %vm536, %v381, -inf
        %541 = vmax.xlane.f32.xlu0 %v540
        %v542 = vpop.xlane.xlu0 %541
        %v543 = vsel %vm536, %v457, -inf
        %544 = vmax.xlane.f32.xlu0 %v543
        %v545 = vpop.xlane.xlu0 %544
        %v546 = vsel %vm536, %v533, -inf
        %547 = vmax.xlane.f32.xlu0 %v546
        %v548 = vpop.xlane.xlu0 %547
        %v549 = vsub.f32 %v305, %v539
        %v550 = vsub.f32 %v381, %v542
        %v551 = vsub.f32 %v457, %v545
        %v552 = vsub.f32 %v533, %v548
        %v553 = vmul.f32 %v549, 1.442695
        %v554 = vpow.pop %v553
        %v555 = vmul.f32 %v550, 1.442695
        %v556 = vpow.pop %v555
        %v557 = vmul.f32 %v551, 1.442695
        %v558 = vpow.pop %v557
        %v559 = vmul.f32 %v552, 1.442695
        %v560 = vpow.pop %v559
        %v561 = vsel %vm536, %v554, 0.0
        %562 = vadd.xlane.f32.xlu0 %v561
        %v563 = vpop.xlane.xlu0 %562
        %v564 = vsel %vm536, %v556, 0.0
        %565 = vadd.xlane.f32.xlu0 %v564
        %v566 = vpop.xlane.xlu0 %565
        %v567 = vsel %vm536, %v558, 0.0
        %568 = vadd.xlane.f32.xlu0 %v567
        %v569 = vpop.xlane.xlu0 %568
        %v570 = vsel %vm536, %v560, 0.0
        %571 = vadd.xlane.f32.xlu0 %v570
        %v572 = vpop.xlane.xlu0 %571
        %v573 = vrcp.pop %v563
        %v574 = vrcp.pop %v566
        %v575 = vrcp.pop %v569
        %v576 = vrcp.pop %v572
        %v577 = vmul.f32 %v554, %v573
        %v578 = vmul.f32 %v556, %v574
        %v579 = vmul.f32 %v558, %v575
        %v580 = vmul.f32 %v560, %v576
        %581 = vst.msk [vmem:[%s218] sm:$0xff] %vm536, %v577
        %582 = vst.msk [vmem:[%s218 + $0x8] sm:$0xff] %vm536, %v578
        %583 = vst.msk [vmem:[%s218 + $0x10] sm:$0xff] %vm536, %v579
        %584 = vst.msk [vmem:[%s218 + $0x18] sm:$0xff] %vm536, %v580
        %s585 = sand.u32 %s98, 1
        %s586 = scalar_lea.sflag [#allocation4], %s585
        %s587 = sand.u32 %s98, 1
        %s588 = smul.addr %s587, 32
        %s589 = scalar_lea.vmem [#allocation7], %s588
        // Predicated region
        $region37: #{scaled_dot_product_attention.1} parent=27 // pred_check
          %p590 = pneg %p108
        $region38: #{scaled_dot_product_attention.1} parent=27 // pred_check_branch
          %592 = sbr.rel (%p590) target = $region40
        $region39: #{scaled_dot_product_attention.1} parent=27 // pred_region
          %s594 = ssub.s32 512, 512
          %595 = vsyncadd %s586, %s594
          %s596 = smul.addr %s26, 4
          %s597 = sadd.s32 %s27, %s596
          %s598 = smul.addr %s597, 128
          %s599 = scalar_lea.hbm %s2, %s598
          %s600 = sshll.u32 %s589, 4
          %s601 = int_to_ptr.vmem [resolvable:$true] %s600
          %606 = dma.vmem_to_hbm [thread:$0]  %s601, 512, %s599, %s586, 128, 128, 8
        $region40: #{scaled_dot_product_attention.1} parent=27 // pred_fallthru
          _
      $region28: #{scaled_dot_product_attention.1} parent=5 // pred_fallthru
        _
      %p607 = scmp.le.s32.totalorder 2, %s17
      // Predicated region
      $region41: #{scaled_dot_product_attention.1} parent=5 // pred_check
        %p608 = pneg %p607
      $region42: #{scaled_dot_product_attention.1} parent=5 // pred_check_branch
        %610 = sbr.rel (%p608) target = $region44
      $region43: #{scaled_dot_product_attention.1} parent=5 // pred_region
        %s611 = ssub.s32 %s17, 2
        // Predicated region
        $region45: #{scaled_dot_product_attention.1} parent=43 // pred_check
          %p612 = pneg %p114
        $region46: #{scaled_dot_product_attention.1} parent=43 // pred_check_branch
          %614 = sbr.rel (%p612) target = $region48
        $region47: #{scaled_dot_product_attention.1} parent=43 // pred_region
          %s615 = sand.u32 %s99, 1
          %s616 = scalar_lea.sflag [#allocation4], %s615
          %s617 = sand.u32 %s99, 1
          %s618 = smul.addr %s617, 32
          %s619 = scalar_lea.vmem [#allocation7], %s618
          %620 = dma.done %s616, 512
        $region48: #{scaled_dot_product_attention.1} parent=43 // pred_fallthru
          _
      $region44: #{scaled_dot_product_attention.1} parent=5 // pred_fallthru
        _
    $region6: #{scaled_dot_product_attention.1} parent=1 // loop_footer
      %s21 = sadd.s32 1, %s17
    $region7: #{scaled_dot_product_attention.1} parent=1 // loop_footer_branch
      %16 = sbr.rel target = $region3
    $region8: #{scaled_dot_product_attention.1} parent=1 // loop_exit
      _
    %621 = vsyncpa [#allocation3], 1
    %s622 = scalar_lea.sflag [#allocation3], 1
    %623 = vsyncpa %s622, 1
    %624 = vsyncpa [#allocation6], 1
    %s625 = scalar_lea.sflag [#allocation6], 1
    %626 = vsyncpa %s625, 1
    %627 = vsyncpa [#allocation4], 1
    %s628 = scalar_lea.sflag [#allocation4], 1
    %629 = vsyncpa %s628, 1

</llo_original>
